<compile_context>
chip_gen: v7x
topology: tpu7x:2x2x1
jax: 0.10.0
libtpu: 0.0.40
codegen_flags: <defaults>
</compile_context>

<pallas_src>
import functools
import math

import jax
import jax.numpy as jnp
from jax import lax
from jax.experimental import pallas as pl
from jax.experimental.pallas import tpu as pltpu


def _round_up(a, b):
    return (a + b - 1) // b * b


# ----------------------------- Pallas kernel ------------------------------

def _fused_linear_softmax_kernel(x_ref, w_ref, b_ref, o_ref, *, n_cls):
    """One M-tile: logits = x @ W + b, softmax over columns [0, n_cls).

    x: (TM, K)   w: (K, Npad)   b: (1, Npad)   o: (TM, n_cls)

    Packed-weight columns: [0, n_cls) = fc classes, [n_cls] = fc_rej logit
    (computed then discarded, like the PyTorch forward), rest = zero padding
    to a 128-lane multiple.
    """
    logits = jnp.dot(x_ref[...], w_ref[...], preferred_element_type=jnp.float32)
    logits = logits + b_ref[...]

    col = lax.broadcasted_iota(jnp.int32, logits.shape, 1)
    masked = jnp.where(col < n_cls, logits, -1e30)     # exclude rej + padding cols
    m = jnp.max(masked, axis=-1, keepdims=True)
    e = jnp.exp(masked - m)                            # masked cols -> exactly 0
    denom = jnp.sum(e, axis=-1, keepdims=True)
    probs = e * pl.reciprocal(denom, approx=True)      # EUP slot, effectively free
    o_ref[...] = probs[:, :n_cls].astype(o_ref.dtype)  # narrow store, no post-slice


# --------------------------- params & packing -----------------------------

def init_params(key, input_dim, out_dim):
    """Match Linear_net_rej's init: weights = ones, biases = PyTorch default uniform."""
    kb1, kb2 = jax.random.split(key)
    bound = 1.0 / math.sqrt(input_dim)
    return {
        # stored (in, out) so the kernel matmul needs no transpose
        "fc_w": jnp.ones((input_dim, out_dim + 1), jnp.float32),
        "fc_b": jax.random.uniform(kb1, (out_dim + 1,), jnp.float32, -bound, bound),
        "fc_rej_w": jnp.ones((input_dim, 1), jnp.float32),
        "fc_rej_b": jax.random.uniform(kb2, (1,), jnp.float32, -bound, bound),
    }


def pack_params(params):
    """One-time prep: fuse fc + fc_rej into a single lane-dense weight/bias.

    The weight keeps its natural K rows (no K padding needed — x is fed
    unpadded); only the column axis is zero-padded to a multiple of 128.
    """
    w = jnp.concatenate([params["fc_w"], params["fc_rej_w"]], axis=1)  # (K, n_cls+1)
    b = jnp.concatenate([params["fc_b"], params["fc_rej_b"]], axis=0)  # (n_cls+1,)
    k, n = w.shape
    n_cls = n - 1
    n_pad = _round_up(n, 128)
    w_p = jnp.zeros((k, n_pad), jnp.float32).at[:, :n].set(w)          # (K, 128)
    b_p = jnp.zeros((1, n_pad), jnp.float32).at[0, :n].set(b)          # (1, 128)
    return w_p, b_p, n_cls


# ------------------------------- forward ----------------------------------

# Rows per grid step.  With K unpadded (f32): x tile = TM*K*4 B, out tile =
# TM*n_cls*4 B -> at TM=2048, K=32, n_cls=11 that's ~0.26 MiB + ~0.09 MiB per
# buffer; double-buffered + the (K,128) weight this is ~1 MiB, comfortably
# inside the 16 MiB scoped-VMEM default on v5e and the 32 MiB on v6e/v7x.
_TM_MAX = 2048


@functools.partial(jax.jit, static_argnames=("n_cls",))
def linear_net_rej_forward(w_packed, b_packed, x, *, n_cls):
    """x: (B, input_dim) -> softmax probabilities (B, out_dim + 1).

    The fc_rej logit is computed inside the same kernel (column n_cls of the
    packed weight) but — exactly like the PyTorch forward — it is discarded.
    """
    x = x.astype(jnp.float32)
    m, k = x.shape
    k_w, n_pad = w_packed.shape
    assert k == k_w, "x feature dim must match packed weight"

    tm = min(_TM_MAX, _round_up(m, 8))
    grid = (pl.cdiv(m, tm),)  # M remainder handled by Pallas boundary masking

    kernel = functools.partial(_fused_linear_softmax_kernel, n_cls=n_cls)
    out = pl.pallas_call(
        kernel,
        out_shape=jax.ShapeDtypeStruct((m, n_cls), jnp.float32),
        grid=grid,
        in_specs=[
            # x at its natural shape: last dim == full array dim -> legal,
            # and no host-side zero-pad pass or K-padding DMA waste.
            pl.BlockSpec((tm, k), lambda i: (i, 0)),
            pl.BlockSpec((k, n_pad), lambda i: (0, 0)),   # full packed weight
            pl.BlockSpec((1, n_pad), lambda i: (0, 0)),   # full packed bias
        ],
        # Narrow output (n_cls lanes): ~11.6x less output HBM traffic and no
        # post-kernel slice pass.
        out_specs=pl.BlockSpec((tm, n_cls), lambda i: (i, 0)),
        compiler_params=pltpu.CompilerParams(
            dimension_semantics=("parallel",),      # megacore / v7x 2nd TensorCore
            vmem_limit_bytes=16 * 1024 * 1024,      # safe on every generation
        ),
    )(x, w_packed, b_packed)

    return out


# --------------------------------- main ------------------------------------

if __name__ == "__main__":
    input_dim, out_dim, batch = 32, 10, 2
    key = jax.random.PRNGKey(0)
    pkey, xkey = jax.random.split(key)

    params = init_params(pkey, input_dim, out_dim)
    w_packed, b_packed, n_cls = pack_params(params)

    x = jax.random.normal(xkey, (batch, input_dim), dtype=jnp.float32)

    probs = linear_net_rej_forward(w_packed, b_packed, x, n_cls=n_cls)
    jax.block_until_ready(probs)

    # pure-JAX reference, mirrors the PyTorch forward: softmax(fc(x), dim=1)
    logits_ref = x @ params["fc_w"] + params["fc_b"]
    probs_ref = jax.nn.softmax(logits_ref, axis=-1)

    assert probs.shape == (batch, out_dim + 1)
    assert jnp.allclose(jnp.sum(probs, axis=-1), 1.0, atol=2e-3)
    assert jnp.allclose(probs, probs_ref, atol=2e-3, rtol=2e-3)
    print("KERNEL_OK")
</pallas_src>

<mosaic_0001>
module attributes {stable_mosaic.version = 11 : i64} {
  func.func @_fused_linear_softmax_kernel(%arg0: i32, %arg1: memref<8x32xf32, #tpu.memory_space<vmem>>, %arg2: memref<32x128xf32, #tpu.memory_space<vmem>>, %arg3: memref<1x128xf32, #tpu.memory_space<vmem>>, %arg4: memref<8x11xf32, #tpu.memory_space<vmem>>) attributes {dimension_semantics = [#tpu.dimension_semantics<parallel>], iteration_bounds = array<i64: 1>, scalar_prefetch = 0 : i64, scratch_operands = 0 : i64, tpu.core_type = #tpu.core_type<tc>, window_params = [{transform_indices = @transform_0, window_bounds = array<i64: 8, 32>}, {pipeline_mode = #tpu.pipeline_mode<synchronous>, transform_indices = @transform_1, window_bounds = array<i64: 32, 128>}, {pipeline_mode = #tpu.pipeline_mode<synchronous>, transform_indices = @transform_2, window_bounds = array<i64: 1, 128>}, {transform_indices = @transform_3, window_bounds = array<i64: 8, 11>}]} {
    %c0 = arith.constant 0 : index
    %c0_0 = arith.constant 0 : index
    %0 = vector.load %arg1[%c0, %c0_0] : memref<8x32xf32, #tpu.memory_space<vmem>>, vector<8x32xf32>
    %c0_1 = arith.constant 0 : index
    %c0_2 = arith.constant 0 : index
    %1 = vector.load %arg2[%c0_1, %c0_2] : memref<32x128xf32, #tpu.memory_space<vmem>>, vector<32x128xf32>
    %cst = arith.constant dense<0.000000e+00> : vector<8x128xf32>
    %2 = tpu.matmul %0, %1, %cst {dimension_numbers = #tpu.dot_dimension_numbers<[1], [0], [0], [1], [0, 0, 1, 1], [], []>} : vector<8x32xf32>, vector<32x128xf32>, vector<8x128xf32> -> vector<8x128xf32>
    %c0_3 = arith.constant 0 : index
    %c0_4 = arith.constant 0 : index
    %3 = vector.load %arg3[%c0_3, %c0_4] : memref<1x128xf32, #tpu.memory_space<vmem>>, vector<1x128xf32>
    %4 = vector.broadcast %3 : vector<1x128xf32> to vector<8x128xf32>
    %5 = arith.addf %2, %4 : vector<8x128xf32>
    %6 = tpu.iota {dimensions = array<i32: 1>} : vector<8x128xi32>
    %c11_i32 = arith.constant 11 : i32
    %7 = vector.broadcast %c11_i32 : i32 to vector<8x128xi32>
    %8 = arith.cmpi slt, %6, %7 : vector<8x128xi32>
    %cst_5 = arith.constant -1.000000e+30 : f32
    %9 = vector.broadcast %cst_5 : f32 to vector<8x128xf32>
    %10 = arith.select %8, %5, %9 : vector<8x128xi1>, vector<8x128xf32>
    %cst_6 = arith.constant dense<0xFF800000> : vector<8xf32>
    %11 = vector.multi_reduction <maximumf>, %10, %cst_6 [1] : vector<8x128xf32> to vector<8xf32>
    %12 = vector.shape_cast %11 : vector<8xf32> to vector<8x1xf32>
    %13 = vector.broadcast %12 : vector<8x1xf32> to vector<8x128xf32>
    %14 = arith.subf %10, %13 : vector<8x128xf32>
    %15 = math.exp %14 : vector<8x128xf32>
    %cst_7 = arith.constant dense<0.000000e+00> : vector<8xf32>
    %16 = vector.multi_reduction <add>, %15, %cst_7 [1] : vector<8x128xf32> to vector<8xf32>
    %17 = vector.shape_cast %16 : vector<8xf32> to vector<8x1xf32>
    %18 = tpu.reciprocal %17 {approx = true} : vector<8x1xf32> -> vector<8x1xf32>
    %19 = vector.broadcast %18 : vector<8x1xf32> to vector<8x128xf32>
    %20 = arith.mulf %15, %19 : vector<8x128xf32>
    %21 = vector.extract_strided_slice %20 {offsets = [0, 0], sizes = [8, 11], strides = [1, 1]} : vector<8x128xf32> to vector<8x11xf32>
    %c0_8 = arith.constant 0 : index
    %c0_9 = arith.constant 0 : index
    %22 = vector.load %arg4[%c0_8, %c0_9] : memref<8x11xf32, #tpu.memory_space<vmem>>, vector<8x11xf32>
    tpu.vector_store %arg4[%c0_8, %c0_9], %21 {strides = array<i32>} : memref<8x11xf32, #tpu.memory_space<vmem>>, vector<8x11xf32>,
    return
  }
  func.func @transform_0(%arg0: i32) -> (i32, i32) {
    %c0_i32 = arith.constant 0 : i32
    %c0_i32_0 = arith.constant 0 : i32
    return %arg0, %c0_i32 : i32, i32
  }
  func.func @transform_1(%arg0: i32) -> (i32, i32) {
    %c0_i32 = arith.constant 0 : i32
    %c0_i32_0 = arith.constant 0 : i32
    %c0_i32_1 = arith.constant 0 : i32
    return %c0_i32, %c0_i32_0 : i32, i32
  }
  func.func @transform_2(%arg0: i32) -> (i32, i32) {
    %c0_i32 = arith.constant 0 : i32
    %c0_i32_0 = arith.constant 0 : i32
    %c0_i32_1 = arith.constant 0 : i32
    return %c0_i32, %c0_i32_0 : i32, i32
  }
  func.func @transform_3(%arg0: i32) -> (i32, i32) {
    %c0_i32 = arith.constant 0 : i32
    %c0_i32_0 = arith.constant 0 : i32
    return %arg0, %c0_i32 : i32, i32
  }
}

</mosaic_0001>

<llo_original>
// kernel: linear_net_rej_forward.1
$region0: #{linear_net_rej_forward.1}
  #allocation0 [shape = 'u32[]', space=smem, size = 0x4, offset = 0x4, fixed_abs, tag = 'smem constant byte address 0x4 - core index']
  #allocation1 [shape = 'u32[144,128]{1,0:T(1,128)}', space=vmem, size = 0x12000, scoped, tag = 'internal scratch']
  %s0 = inlined_call_operand.vmem [shape: f32[2,32], index: 0, kind: input, shape index: {}]
  %s1 = inlined_call_operand.hbm [shape: f32[32,128], index: 1, kind: input, shape index: {}]
  %s2 = inlined_call_operand.vmem [shape: f32[1,128], index: 2, kind: input, shape index: {}]
  %s3 = inlined_call_operand.hbm [shape: f32[2,11], index: 3, kind: output, shape index: {}]
  %s4 = sld [smem:[#allocation0]]
  $region26: #{linear_net_rej_forward.1} parent=0
    _
  %s6 = ssub.s32 1, %s4
  %s7 = scalar_select 0, %s6, %s4
  $region1: #{linear_net_rej_forward.1} parent=0
    #allocation2 [shape = 'u8[16384]{0}', space=vmem, size = 0x4000, scoped, tag = 'input window, operand 1, single buffered']
    #allocation3 [shape = 's32[1]{0}', space=sflag, size = 0x4, scoped, tag = 'scoped memory for linear_net_rej_forward.1']
    #allocation4 [shape = 's32[1]{0}', space=sflag, size = 0x4, scoped, tag = 'scoped memory for linear_net_rej_forward.1']
    #allocation5 [shape = 'u8[4096]{0}', space=vmem, size = 0x1000, scoped, tag = 'output window, operand 0, single buffered']
    %8 = vsyncpa [#allocation3], 0
    %9 = vsyncpa [#allocation4], 0
    // Predicated region
    $region2: #{linear_net_rej_forward.1} parent=1 // pred_check
      _
    $region3: #{linear_net_rej_forward.1} parent=1 // pred_check_branch
      %11 = sbr.rel (0) target = $region5
    $region4: #{linear_net_rej_forward.1} parent=1 // pred_region
      _
    $region5: #{linear_net_rej_forward.1} parent=1 // pred_fallthru
      _
    // Predicated region
    $region6: #{linear_net_rej_forward.1} parent=1 // pred_check
      _
    $region7: #{linear_net_rej_forward.1} parent=1 // pred_check_branch
      %13 = sbr.rel (0) target = $region9
    $region8: #{linear_net_rej_forward.1} parent=1 // pred_region
      %s15 = ssub.s32 512, 512
      %16 = vsyncadd [#allocation3], %s15
      %s17 = sshll.u32 [#allocation2], 4
      %s18 = int_to_ptr.vmem [resolvable:$true] %s17
      %23 = dma.hbm_to_vmem [thread:$0]  %s1, 512, %s18, [#allocation3], 128, 128, 8
    $region9: #{linear_net_rej_forward.1} parent=1 // pred_fallthru
      _
    // Predicated region
    $region10: #{linear_net_rej_forward.1} parent=1 // pred_check
      _
    $region11: #{linear_net_rej_forward.1} parent=1 // pred_check_branch
      %25 = sbr.rel (0) target = $region13
    $region12: #{linear_net_rej_forward.1} parent=1 // pred_region
      _
    $region13: #{linear_net_rej_forward.1} parent=1 // pred_fallthru
      _
    // Predicated region
    $region14: #{linear_net_rej_forward.1} parent=1 // pred_check
      _
    $region15: #{linear_net_rej_forward.1} parent=1 // pred_check_branch
      %27 = sbr.rel (0) target = $region17
    $region16: #{linear_net_rej_forward.1} parent=1 // pred_region
      %28 = dma.done [#allocation3], 512
    $region17: #{linear_net_rej_forward.1} parent=1 // pred_fallthru
      _
    %v29 = vld [vmem:[%s0] sm:$0xff]
    %v30 = vld [vmem:[#allocation2] sm:$0xff]
    %v31 = vld [vmem:[#allocation2 + $0x8] sm:$0xff]
    %v32 = vld [vmem:[#allocation2 + $0x10] sm:$0xff]
    %v33 = vld [vmem:[#allocation2 + $0x18] sm:$0xff]
    %v34 = vld [vmem:[%s2] sm:$0x1]
    %v36 = vlaneseq
    %v37 = vshrl.u32 %v36, 7
    %v38 = vsub.s32 0, %v37
    %v39 = vrot.slane %v34, %v38
    %vm41 = vcmask 261120
    %v43 = vsel %vm41, %v29, 0
    %45 = vmatprep.subr.mxu0 0.0
    %46 = vmatpush1.msra.mxu0 %v30
    %47 = vmatprep.subr.mxu0 0.0
    %48 = vmatpush1.msra.mxu0 %v31
    %49 = vmatprep.subr.mxu0 0.0
    %50 = vmatpush1.msra.mxu0 %v32
    %51 = vmatprep.subr.mxu0 0.0
    %52 = vmatpush1.msra.mxu0 %v33
    %53 = vmatprep.subr.mxu0 0.0
    %54 = vmatpush1.msra.mxu0 0.0
    %55 = vmatprep.subr.mxu0 0.0
    %56 = vmatpush1.msra.mxu0 0.0
    %57 = vmatprep.subr.mxu0 0.0
    %58 = vmatpush1.msra.mxu0 0.0
    %59 = vmatprep.subr.mxu0 0.0
    %60 = vmatpush1.msra.mxu0 0.0
    %61 = vmatprep.subr.mxu0 0.0
    %62 = vmatpush1.msra.mxu0 0.0
    %63 = vmatprep.subr.mxu0 0.0
    %64 = vmatpush1.msra.mxu0 0.0
    %65 = vmatprep.subr.mxu0 0.0
    %66 = vmatpush1.msra.mxu0 0.0
    %67 = vmatprep.subr.mxu0 0.0
    %68 = vmatpush1.msra.mxu0 0.0
    %69 = vmatprep.subr.mxu0 0.0
    %70 = vmatpush1.msra.mxu0 0.0
    %71 = vmatprep.subr.mxu0 0.0
    %72 = vmatpush1.msra.mxu0 0.0
    %73 = vmatprep.subr.mxu0 0.0
    %74 = vmatpush1.msra.mxu0 0.0
    %75 = vmatprep.subr.mxu0 0.0
    %76 = vmatpush1.msra.mxu0 0.0
    %77 = vmatprep.subr.mxu0 0.0
    %78 = vmatpush1.msra.mxu0 0.0
    %79 = vmatprep.subr.mxu0 0.0
    %80 = vmatpush1.msra.mxu0 0.0
    %81 = vmatprep.subr.mxu0 0.0
    %82 = vmatpush1.msra.mxu0 0.0
    %83 = vmatprep.subr.mxu0 0.0
    %84 = vmatpush1.msra.mxu0 0.0
    %85 = vmatprep.subr.mxu0 0.0
    %86 = vmatpush1.msra.mxu0 0.0
    %87 = vmatprep.subr.mxu0 0.0
    %88 = vmatpush1.msra.mxu0 0.0
    %89 = vmatprep.subr.mxu0 0.0
    %90 = vmatpush1.msra.mxu0 0.0
    %91 = vmatprep.subr.mxu0 0.0
    %92 = vmatpush1.msra.mxu0 0.0
    %93 = vmatprep.subr.mxu0 0.0
    %94 = vmatpush1.msra.mxu0 0.0
    %95 = vmatprep.subr.mxu0 0.0
    %96 = vmatpush1.msra.mxu0 0.0
    %97 = vmatprep.subr.mxu0 0.0
    %98 = vmatpush1.msra.mxu0 0.0
    %99 = vmatprep.subr.mxu0 0.0
    %100 = vmatpush1.msra.mxu0 0.0
    %101 = vmatprep.subr.mxu0 0.0
    %102 = vmatpush1.msra.mxu0 0.0
    %103 = vmatprep.subr.mxu0 0.0
    %104 = vmatpush1.msra.mxu0 0.0
    %105 = vmatprep.subr.mxu0 0.0
    %106 = vmatpush1.msra.mxu0 0.0
    %107 = vmatprep.subr.mxu0 0.0
    %108 = vmatpush1.msra.mxu0 0.0
    %109 = vmatprep.mubr.f32.mxu0 0.0
    %110 = vmatmul.mubr.f32.gmra.mrb[0].mxu0 %v43
    %v111 = vpop.f32.mrb[0].mxu0
    %v112 = vadd.f32 %v39, %v111
    %v113 = vpop.f32.mrb[0].mxu0
    %114 = vdwg.mxu0
    %v115 = vlaneseq
    %v116 = vand.u32 %v115, 127
    %vm117 = vcmp.lt.s32.totalorder %v116, 11
    %v118 = vsel %vm117, %v112, -1e+30
    %119 = vmax.xlane.f32.xlu0 %v118
    %v120 = vpop.xlane.xlu0 %119
    %v121 = vsub.f32 %v118, %v120
    %v122 = vmul.f32 %v121, 1.442695
    %v123 = vpow.pop %v122
    %124 = vadd.xlane.f32.xlu0 %v123
    %v125 = vpop.xlane.xlu0 %124
    %v126 = vrcp.pop %v125
    %v127 = vmul.f32 %v123, %v126
    %vm128 = vcmask 89088
    %129 = vst.msk [vmem:[#allocation5] sm:$0xff] %vm128, %v127
    // Predicated region
    $region18: #{linear_net_rej_forward.1} parent=1 // pred_check
      _
    $region19: #{linear_net_rej_forward.1} parent=1 // pred_check_branch
      %131 = sbr.rel (0) target = $region21
    $region20: #{linear_net_rej_forward.1} parent=1 // pred_region
      %s133 = ssub.s32 128, 32
      %134 = vsyncadd [#allocation4], %s133
      %s135 = sshll.u32 [#allocation5], 4
      %s136 = int_to_ptr.vmem [resolvable:$true] %s135
      %141 = dma.vmem_to_hbm [thread:$0]  %s136, 32, %s3, [#allocation4], 32, 32, 2
    $region21: #{linear_net_rej_forward.1} parent=1 // pred_fallthru
      _
    // Predicated region
    $region22: #{linear_net_rej_forward.1} parent=1 // pred_check
      _
    $region23: #{linear_net_rej_forward.1} parent=1 // pred_check_branch
      %143 = sbr.rel (0) target = $region25
    $region24: #{linear_net_rej_forward.1} parent=1 // pred_region
      %144 = dma.done [#allocation4], 128
    $region25: #{linear_net_rej_forward.1} parent=1 // pred_fallthru
      _
    %145 = vsyncpa [#allocation3], 1
    %146 = vsyncpa [#allocation4], 1

</llo_original>
